<compile_context>
chip_gen: v7x
topology: tpu7x:2x2x1
jax: 0.10.0
libtpu: 0.0.40
codegen_flags: <defaults>
</compile_context>

<pallas_src>
import numpy as np
import jax
import jax.numpy as jnp
from jax import lax
from jax.experimental import pallas as pl
from jax.experimental.pallas import tpu as pltpu


# ----------------------------------------------------------------------------
# LSQ weight quantization (inference-time)
# ----------------------------------------------------------------------------
def _lsq_quantize_weight(w, nbits):
    Qn = -(2 ** (nbits - 1))
    Qp = 2 ** (nbits - 1) - 1
    alpha = 2.0 * jnp.mean(jnp.abs(w)) / jnp.sqrt(float(Qp))
    return jnp.clip(jnp.round(w / alpha), Qn, Qp) * alpha


# ----------------------------------------------------------------------------
# Pallas kernel factory
# ----------------------------------------------------------------------------
def _make_kernel(H, W, Ho, Wo, hidden, oup, stride, do_expand, identity, B):
    """One grid step processes a batch tile of B images, fully fused, all
    activations stay in the lane-dense (rows, W*C) layout."""
    BH = B * H
    Wh = W * hidden

    def kernel(*refs):
        if do_expand:
            x_ref, w1_ref, b1_ref, w2_ref, b2_ref, w3_ref, b3_ref, o_ref = refs[:8]
            scratch = refs[8:]
        else:
            x_ref, w2_ref, b2_ref, w3_ref, b3_ref, o_ref = refs[:6]
            scratch = refs[6:]

        xs = x_ref[...]                            # (B*H, W*Cin), lane-dense f32

        # ---- 1x1 expand conv: block-diagonal MXU matmul (BN folded), +bias, ReLU6
        if do_expand:
            t = jnp.dot(xs, w1_ref[...], preferred_element_type=jnp.float32)
            t = jnp.clip(t + b1_ref[...], 0.0, 6.0)
        else:
            t = xs                                 # hidden == inp here

        # ---- 3x3 depthwise conv on the lane-dense (B*H, W*hidden) slab ----
        # W-shifts = lane rolls by +-hidden, H-shifts = sublane rolls by +-1 row.
        # W-border masks are folded into w2 (wrapper); H-border masks (which also
        # kill the circular wrap / cross-image leak) are applied once per dy.
        h_row = lax.broadcasted_iota(jnp.int32, (BH, 1), 0) % H
        valid_up = h_row >= 1                      # dy = -1 tap in-bounds
        valid_dn = h_row <= H - 2                  # dy = +1 tap in-bounds
        w2_all = w2_ref[...]                       # (9, W*hidden), masks folded in

        acc = jnp.zeros((BH, Wh), jnp.float32)
        for dy in range(3):
            dr = dy - 1
            if dr == 0:
                rows = t
            else:
                rows = pltpu.roll(t, shift=(-dr) % BH, axis=0)
                rows = jnp.where(valid_up if dr == -1 else valid_dn, rows, 0.0)
            for dx in range(3):
                dl = dx - 1
                tap = rows if dl == 0 else pltpu.roll(
                    rows, shift=(-dl * hidden) % Wh, axis=1)
                k = 3 * dy + dx
                acc = acc + tap * w2_all[k:k + 1, :]   # 2-D per-tap weight read

        u = jnp.clip(acc + b2_ref[...], 0.0, 6.0)       # BN bias + ReLU6

        # ---- stride: H-decimation via one vectorized strided VMEM read ----
        if stride != 1:
            (u_buf,) = scratch
            u_buf[...] = u
            # global full-res row of decimated row i is stride*i (H % stride == 0)
            u = u_buf[pl.ds(0, B * Ho, stride=stride), :]   # (B*Ho, W*hidden)

        # ---- 1x1 project conv: block-diag RHS (also does W-decimation), +bias
        y = jnp.dot(u, w3_ref[...], preferred_element_type=jnp.float32)
        y = y + b3_ref[...]

        if identity:                                   # residual, full f32
            y = y + xs

        o_ref[...] = y.astype(o_ref.dtype)             # dense 128-lane store

    return kernel


# ----------------------------------------------------------------------------
# Batch-tile heuristic: VMEM bytes AND vreg pressure, >=2 grid steps if possible
# ----------------------------------------------------------------------------
def _choose_batch_tile(N, H, Ho, W, Wo, inp, hidden, oup, stride, vmem_cap):
    per_image = 4 * (2 * H * W * inp            # double-buffered input block
                     + 2 * Ho * Wo * oup        # double-buffered output block
                     + 4 * H * W * hidden       # live depthwise slabs (t/rows/tap/acc)
                     + (H * W * hidden if stride > 1 else 0))   # stride-2 scratch
    byte_cap = max(1, (vmem_cap // 4) // max(per_image, 1))
    row_cap = max(1, 64 // H)                   # keep B*H <= ~64 rows (vreg pressure)
    cap = max(1, min(byte_cap, row_cap, N))
    if N >= 2:
        cap = min(cap, max(1, N // 2))          # >=2 grid steps (v7x: 2 TCs)
    # legal tiles: divisor of N whose block rows satisfy the (8,128) sublane rule
    # (a full-array block, b == N, is exempt from the rule)
    candidates = [b for b in range(1, N + 1)
                  if N % b == 0 and
                  (((b * H) % 8 == 0 and (b * Ho) % 8 == 0) or b == N)]
    fitting = [b for b in candidates if b <= cap]
    return max(fitting) if fitting else min(candidates)


# ----------------------------------------------------------------------------
# Wrapper: NCHW <-> lane-dense layouts, BN + mask folding, pallas_call
# ----------------------------------------------------------------------------
def quant_inverted_residual(x_nchw, params, *, inp, oup, stride, expand_ratio,
                            batch_tile=None):
    N, Cin, H, W = x_nchw.shape
    assert Cin == inp and stride in (1, 2)
    hidden = int(round(inp * expand_ratio))
    do_expand = (expand_ratio != 1)
    if not do_expand:
        assert hidden == inp
    identity = (stride == 1 and inp == oup)
    if stride > 1:
        # TODO(synk): odd H/W at stride=2 would need a gather-based decimation.
        assert H % stride == 0 and W % stride == 0
    Ho, Wo = H // stride, W // stride

    # Generation-aware VMEM budgeting (v7x: 64 MiB per TC; v5e/v6e: 128 MiB).
    try:
        vmem_cap = int(pltpu.get_tpu_info().vmem_capacity_bytes)
    except Exception:
        vmem_cap = 128 * 1024 * 1024
    vmem_limit = int(min(32 * 1024 * 1024, max(16 * 1024 * 1024, vmem_cap // 4)))

    if batch_tile is None:
        batch_tile = _choose_batch_tile(N, H, Ho, W, Wo, inp, hidden, oup,
                                        stride, vmem_cap)
    assert N % batch_tile == 0
    B = batch_tile

    # ---- lane-dense input: (N*H, W*Cin) ----
    x = jnp.transpose(x_nchw, (0, 2, 3, 1)).astype(jnp.float32) \
           .reshape(N * H, W * inp)

    # ---- fold eval-mode BN scales into the (LSQ-quantized) conv weights ----
    s1, b1 = params['s1'], params['b1']
    s2, b2 = params['s2'], params['b2']
    s3, b3 = params['s3'], params['b3']

    eyeW = jnp.eye(W, dtype=jnp.float32)
    operands = [x]
    in_specs = [pl.BlockSpec((B * H, W * inp), lambda n: (n, 0))]

    def full(shape):
        return pl.BlockSpec(shape, lambda n: (0,) * len(shape))

    if do_expand:
        w1 = jnp.transpose(params['w1_oihw'][:, :, 0, 0], (1, 0)) * s1[None, :]
        w1bd = jnp.kron(eyeW, w1)                               # (W*Cin, W*hidden)
        b1t = jnp.tile(b1.reshape(1, hidden), (1, W))           # (1, W*hidden)
        operands += [w1bd, b1t]
        in_specs += [full((W * inp, W * hidden)), full((1, W * hidden))]

    # depthwise weights: (3,3,hidden) -> (9, W*hidden) pre-tiled, W-border masks folded
    w2 = jnp.transpose(params['w2_oihw'][:, 0, :, :], (1, 2, 0)) * s2[None, None, :]
    w2t = jnp.tile(w2.reshape(9, hidden), (1, W))               # (9, W*hidden)
    w_idx = jnp.repeat(jnp.arange(W), hidden)                   # lane -> w index
    mask_m1 = (w_idx >= 1).astype(jnp.float32)                  # dx = -1 valid lanes
    mask_p1 = (w_idx <= W - 2).astype(jnp.float32)              # dx = +1 valid lanes
    lane_masks = jnp.stack([mask_m1, jnp.ones_like(mask_m1), mask_p1], axis=0)
    w2t = w2t * lane_masks[jnp.arange(9) % 3]
    b2t = jnp.tile(b2.reshape(1, hidden), (1, W))               # (1, W*hidden)

    # project weights: block-diag + folded stride-W decimation -> (W*hidden, Wo*oup)
    sel = (jnp.arange(W)[:, None] == stride * jnp.arange(Wo)[None, :]) \
        .astype(jnp.float32)                                    # (W, Wo)
    w3 = jnp.transpose(params['w3_oihw'][:, :, 0, 0], (1, 0)) * s3[None, :]
    w3bd = jnp.kron(sel, w3)
    b3t = jnp.tile(b3.reshape(1, oup), (1, Wo))                 # (1, Wo*oup)

    operands += [w2t, b2t, w3bd, b3t]
    in_specs += [full((9, W * hidden)), full((1, W * hidden)),
                 full((W * hidden, Wo * oup)), full((1, Wo * oup))]

    kernel = _make_kernel(H, W, Ho, Wo, hidden, oup, stride,
                          do_expand, identity, B)

    scratch = []
    if stride > 1:
        scratch = [pltpu.VMEM((B * H, W * hidden), jnp.float32)]

    out = pl.pallas_call(
        kernel,
        out_shape=jax.ShapeDtypeStruct((N * Ho, Wo * oup), jnp.float32),
        grid_spec=pltpu.PrefetchScalarGridSpec(
            num_scalar_prefetch=0,
            grid=(N // B,),
            in_specs=in_specs,
            out_specs=pl.BlockSpec((B * Ho, Wo * oup), lambda n: (n, 0)),
            scratch_shapes=scratch),
        compiler_params=pltpu.CompilerParams(
            dimension_semantics=("parallel",),      # batch axis is independent
            vmem_limit_bytes=vmem_limit),
    )(*operands)

    out = out.reshape(N, Ho, Wo, oup)
    return jnp.transpose(out, (0, 3, 1, 2))          # back to NCHW


# ----------------------------------------------------------------------------
# Deterministic parameter construction (shapes follow the PyTorch __init__)
# ----------------------------------------------------------------------------
def build_params(key, inp, oup, bitwidth, expand_ratio):
    hidden = int(round(inp * expand_ratio))
    ks = jax.random.split(key, 16)
    eps = 1e-5

    def kaiming(k, shape, fan_in):
        return jax.random.normal(k, shape, jnp.float32) * np.sqrt(2.0 / fan_in)

    def bn(kg, kb, km, kv, c):
        gamma = 1.0 + 0.1 * jax.random.normal(kg, (c,), jnp.float32)
        beta = 0.1 * jax.random.normal(kb, (c,), jnp.float32)
        mean = 0.1 * jax.random.normal(km, (c,), jnp.float32)
        var = jax.random.uniform(kv, (c,), jnp.float32, minval=0.5, maxval=1.5)
        scale = gamma / jnp.sqrt(var + eps)          # eval-mode BN folded to affine
        bias = beta - mean * scale
        return scale, bias

    p = {}
    if expand_ratio != 1:
        w1 = kaiming(ks[0], (hidden, inp, 1, 1), inp)
        p['w1_oihw'] = _lsq_quantize_weight(w1, bitwidth)
        p['s1'], p['b1'] = bn(ks[1], ks[2], ks[3], ks[4], hidden)
    else:
        p['w1_oihw'] = jnp.zeros((hidden, inp, 1, 1), jnp.float32)   # unused
        p['s1'] = jnp.ones((hidden,), jnp.float32)
        p['b1'] = jnp.zeros((hidden,), jnp.float32)

    w2 = kaiming(ks[5], (hidden, 1, 3, 3), 9)                        # depthwise
    p['w2_oihw'] = _lsq_quantize_weight(w2, bitwidth)
    p['s2'], p['b2'] = bn(ks[6], ks[7], ks[8], ks[9], hidden)

    w3 = kaiming(ks[10], (oup, hidden, 1, 1), hidden)
    p['w3_oihw'] = _lsq_quantize_weight(w3, bitwidth)
    p['s3'], p['b3'] = bn(ks[11], ks[12], ks[13], ks[14], oup)
    return p


# ----------------------------------------------------------------------------
# Pure-JAX reference (same eval-mode semantics, full f32 precision)
# ----------------------------------------------------------------------------
def ref_forward(x_nchw, params, *, inp, oup, stride, expand_ratio):
    hidden = int(round(inp * expand_ratio))
    identity = (stride == 1 and inp == oup)
    dn = ('NCHW', 'OIHW', 'NCHW')
    HIGH = jax.lax.Precision.HIGHEST

    def bnorm(t, s, b):
        return t * s[None, :, None, None] + b[None, :, None, None]

    t = x_nchw
    if expand_ratio != 1:
        t = lax.conv_general_dilated(t, params['w1_oihw'], (1, 1), 'VALID',
                                     dimension_numbers=dn, precision=HIGH)
        t = jnp.clip(bnorm(t, params['s1'], params['b1']), 0.0, 6.0)
    t = lax.conv_general_dilated(t, params['w2_oihw'], (stride, stride),
                                 ((1, 1), (1, 1)), dimension_numbers=dn,
                                 feature_group_count=hidden, precision=HIGH)
    t = jnp.clip(bnorm(t, params['s2'], params['b2']), 0.0, 6.0)
    t = lax.conv_general_dilated(t, params['w3_oihw'], (1, 1), 'VALID',
                                 dimension_numbers=dn, precision=HIGH)
    t = bnorm(t, params['s3'], params['b3'])
    if identity:
        t = t + x_nchw
    return t


if __name__ == "__main__":
    key = jax.random.PRNGKey(0)
    inp, oup, bitwidth, stride, expand_ratio = 8, 8, 4, 1, 2   # hidden=16, identity
    N, H, W = 2, 16, 16

    k_x, k_p = jax.random.split(key)
    x = jax.random.normal(k_x, (N, inp, H, W), jnp.float32)
    params = build_params(k_p, inp, oup, bitwidth, expand_ratio)

    out = quant_inverted_residual(x, params, inp=inp, oup=oup,
                                  stride=stride, expand_ratio=expand_ratio)
    out = jax.block_until_ready(out)

    ref = ref_forward(x, params, inp=inp, oup=oup,
                      stride=stride, expand_ratio=expand_ratio)
    # Tolerance covers single-pass default-precision MXU matmuls vs. the
    # f32/HIGHEST reference; well below the module's own 4-bit weight-quantization
    # error. The residual add is kept in full f32.
    np.testing.assert_allclose(np.asarray(out), np.asarray(ref),
                               rtol=5e-2, atol=5e-2)
    print("KERNEL_OK")
</pallas_src>

<mosaic_0001>
module attributes {stable_mosaic.version = 11 : i64} {
  func.func @kernel(%arg0: i32, %arg1: memref<16x128xf32, #tpu.memory_space<vmem>>, %arg2: memref<128x256xf32, #tpu.memory_space<vmem>>, %arg3: memref<1x256xf32, #tpu.memory_space<vmem>>, %arg4: memref<9x256xf32, #tpu.memory_space<vmem>>, %arg5: memref<1x256xf32, #tpu.memory_space<vmem>>, %arg6: memref<256x128xf32, #tpu.memory_space<vmem>>, %arg7: memref<1x128xf32, #tpu.memory_space<vmem>>, %arg8: memref<16x128xf32, #tpu.memory_space<vmem>>) attributes {dimension_semantics = [#tpu.dimension_semantics<parallel>], iteration_bounds = array<i64: 2>, scalar_prefetch = 0 : i64, scratch_operands = 0 : i64, tpu.core_type = #tpu.core_type<tc>, window_params = [{transform_indices = @transform_0, window_bounds = array<i64: 16, 128>}, {pipeline_mode = #tpu.pipeline_mode<synchronous>, transform_indices = @transform_1, window_bounds = array<i64: 128, 256>}, {pipeline_mode = #tpu.pipeline_mode<synchronous>, transform_indices = @transform_2, window_bounds = array<i64: 1, 256>}, {pipeline_mode = #tpu.pipeline_mode<synchronous>, transform_indices = @transform_3, window_bounds = array<i64: 9, 256>}, {pipeline_mode = #tpu.pipeline_mode<synchronous>, transform_indices = @transform_4, window_bounds = array<i64: 1, 256>}, {pipeline_mode = #tpu.pipeline_mode<synchronous>, transform_indices = @transform_5, window_bounds = array<i64: 256, 128>}, {pipeline_mode = #tpu.pipeline_mode<synchronous>, transform_indices = @transform_6, window_bounds = array<i64: 1, 128>}, {transform_indices = @transform_7, window_bounds = array<i64: 16, 128>}]} {
    %c0 = arith.constant 0 : index
    %c0_0 = arith.constant 0 : index
    %0 = vector.load %arg1[%c0, %c0_0] : memref<16x128xf32, #tpu.memory_space<vmem>>, vector<16x128xf32>
    %c0_1 = arith.constant 0 : index
    %c0_2 = arith.constant 0 : index
    %1 = vector.load %arg2[%c0_1, %c0_2] : memref<128x256xf32, #tpu.memory_space<vmem>>, vector<128x256xf32>
    %cst = arith.constant dense<0.000000e+00> : vector<16x256xf32>
    %2 = tpu.matmul %0, %1, %cst {dimension_numbers = #tpu.dot_dimension_numbers<[1], [0], [0], [1], [0, 0, 1, 1], [], []>} : vector<16x128xf32>, vector<128x256xf32>, vector<16x256xf32> -> vector<16x256xf32>
    %c0_3 = arith.constant 0 : index
    %c0_4 = arith.constant 0 : index
    %3 = vector.load %arg3[%c0_3, %c0_4] : memref<1x256xf32, #tpu.memory_space<vmem>>, vector<1x256xf32>
    %4 = vector.broadcast %3 : vector<1x256xf32> to vector<16x256xf32>
    %5 = arith.addf %2, %4 : vector<16x256xf32>
    %cst_5 = arith.constant 0.000000e+00 : f32
    %cst_6 = arith.constant 6.000000e+00 : f32
    %6 = vector.broadcast %cst_5 : f32 to vector<16x256xf32>
    %7 = arith.maximumf %6, %5 : vector<16x256xf32>
    %8 = vector.broadcast %cst_6 : f32 to vector<16x256xf32>
    %9 = arith.minimumf %8, %7 : vector<16x256xf32>
    %10 = tpu.iota {dimensions = array<i32: 0>} : vector<16x1xi32>
    %c16_i32 = arith.constant 16 : i32
    %c0_i32 = arith.constant 0 : i32
    %11 = arith.cmpi eq, %c16_i32, %c0_i32 : i32
    %c1_i32 = arith.constant 1 : i32
    %12 = arith.select %11, %c1_i32, %c16_i32 : i32
    %13 = vector.broadcast %12 : i32 to vector<16x1xi32>
    %14 = arith.remsi %10, %13 : vector<16x1xi32>
    %c0_i32_7 = arith.constant 0 : i32
    %15 = vector.broadcast %c0_i32_7 : i32 to vector<16x1xi32>
    %16 = arith.cmpi ne, %14, %15 : vector<16x1xi32>
    %c0_i32_8 = arith.constant 0 : i32
    %17 = vector.broadcast %c0_i32_8 : i32 to vector<16x1xi32>
    %18 = arith.cmpi slt, %14, %17 : vector<16x1xi32>
    %c0_i32_9 = arith.constant 0 : i32
    %19 = arith.cmpi slt, %12, %c0_i32_9 : i32
    %20 = vector.broadcast %19 : i1 to vector<16x1xi1>
    %21 = vector.broadcast %20 : vector<16x1xi1> to vector<16x1xi1>
    %22 = arith.xori %18, %21 : vector<16x1xi1>
    %23 = arith.andi %22, %16 : vector<16x1xi1>
    %24 = vector.broadcast %12 : i32 to vector<16x1xi32>
    %25 = arith.addi %14, %24 : vector<16x1xi32>
    %26 = arith.select %23, %25, %14 : vector<16x1xi1>, vector<16x1xi32>
    %c1_i32_10 = arith.constant 1 : i32
    %27 = vector.broadcast %c1_i32_10 : i32 to vector<16x1xi32>
    %28 = arith.cmpi sge, %26, %27 : vector<16x1xi32>
    %c14_i32 = arith.constant 14 : i32
    %29 = vector.broadcast %c14_i32 : i32 to vector<16x1xi32>
    %30 = arith.cmpi sle, %26, %29 : vector<16x1xi32>
    %c0_11 = arith.constant 0 : index
    %c0_12 = arith.constant 0 : index
    %31 = vector.load %arg4[%c0_11, %c0_12] : memref<9x256xf32, #tpu.memory_space<vmem>>, vector<9x256xf32>
    %cst_13 = arith.constant 0.000000e+00 : f32
    %32 = vector.broadcast %cst_13 : f32 to vector<16x256xf32>
    %c1_i32_14 = arith.constant 1 : i32
    %33 = tpu.dynamic_rotate %9 by %c1_i32_14 dim 0 : vector<16x256xf32>, i32 -> vector<16x256xf32>
    %cst_15 = arith.constant 0.000000e+00 : f32
    %34 = vector.shape_cast %28 : vector<16x1xi1> to vector<16x1xi1>
    %35 = vector.broadcast %34 : vector<16x1xi1> to vector<16x256xi1>
    %36 = vector.broadcast %cst_15 : f32 to vector<16x256xf32>
    %37 = arith.select %35, %33, %36 : vector<16x256xi1>, vector<16x256xf32>
    %c16_i32_16 = arith.constant 16 : i32
    %38 = tpu.dynamic_rotate %37 by %c16_i32_16 dim 1 : vector<16x256xf32>, i32 -> vector<16x256xf32>
    %39 = vector.extract_strided_slice %31 {offsets = [0, 0], sizes = [1, 256], strides = [1, 1]} : vector<9x256xf32> to vector<1x256xf32>
    %40 = vector.broadcast %39 : vector<1x256xf32> to vector<16x256xf32>
    %41 = arith.mulf %38, %40 : vector<16x256xf32>
    %42 = arith.addf %32, %41 : vector<16x256xf32>
    %43 = vector.extract_strided_slice %31 {offsets = [1, 0], sizes = [1, 256], strides = [1, 1]} : vector<9x256xf32> to vector<1x256xf32>
    %44 = vector.broadcast %43 : vector<1x256xf32> to vector<16x256xf32>
    %45 = arith.mulf %37, %44 : vector<16x256xf32>
    %46 = arith.addf %42, %45 : vector<16x256xf32>
    %c240_i32 = arith.constant 240 : i32
    %47 = tpu.dynamic_rotate %37 by %c240_i32 dim 1 : vector<16x256xf32>, i32 -> vector<16x256xf32>
    %48 = vector.extract_strided_slice %31 {offsets = [2, 0], sizes = [1, 256], strides = [1, 1]} : vector<9x256xf32> to vector<1x256xf32>
    %49 = vector.broadcast %48 : vector<1x256xf32> to vector<16x256xf32>
    %50 = arith.mulf %47, %49 : vector<16x256xf32>
    %51 = arith.addf %46, %50 : vector<16x256xf32>
    %c16_i32_17 = arith.constant 16 : i32
    %52 = tpu.dynamic_rotate %9 by %c16_i32_17 dim 1 : vector<16x256xf32>, i32 -> vector<16x256xf32>
    %53 = vector.extract_strided_slice %31 {offsets = [3, 0], sizes = [1, 256], strides = [1, 1]} : vector<9x256xf32> to vector<1x256xf32>
    %54 = vector.broadcast %53 : vector<1x256xf32> to vector<16x256xf32>
    %55 = arith.mulf %52, %54 : vector<16x256xf32>
    %56 = arith.addf %51, %55 : vector<16x256xf32>
    %57 = vector.extract_strided_slice %31 {offsets = [4, 0], sizes = [1, 256], strides = [1, 1]} : vector<9x256xf32> to vector<1x256xf32>
    %58 = vector.broadcast %57 : vector<1x256xf32> to vector<16x256xf32>
    %59 = arith.mulf %9, %58 : vector<16x256xf32>
    %60 = arith.addf %56, %59 : vector<16x256xf32>
    %c240_i32_18 = arith.constant 240 : i32
    %61 = tpu.dynamic_rotate %9 by %c240_i32_18 dim 1 : vector<16x256xf32>, i32 -> vector<16x256xf32>
    %62 = vector.extract_strided_slice %31 {offsets = [5, 0], sizes = [1, 256], strides = [1, 1]} : vector<9x256xf32> to vector<1x256xf32>
    %63 = vector.broadcast %62 : vector<1x256xf32> to vector<16x256xf32>
    %64 = arith.mulf %61, %63 : vector<16x256xf32>
    %65 = arith.addf %60, %64 : vector<16x256xf32>
    %c15_i32 = arith.constant 15 : i32
    %66 = tpu.dynamic_rotate %9 by %c15_i32 dim 0 : vector<16x256xf32>, i32 -> vector<16x256xf32>
    %cst_19 = arith.constant 0.000000e+00 : f32
    %67 = vector.shape_cast %30 : vector<16x1xi1> to vector<16x1xi1>
    %68 = vector.broadcast %67 : vector<16x1xi1> to vector<16x256xi1>
    %69 = vector.broadcast %cst_19 : f32 to vector<16x256xf32>
    %70 = arith.select %68, %66, %69 : vector<16x256xi1>, vector<16x256xf32>
    %c16_i32_20 = arith.constant 16 : i32
    %71 = tpu.dynamic_rotate %70 by %c16_i32_20 dim 1 : vector<16x256xf32>, i32 -> vector<16x256xf32>
    %72 = vector.extract_strided_slice %31 {offsets = [6, 0], sizes = [1, 256], strides = [1, 1]} : vector<9x256xf32> to vector<1x256xf32>
    %73 = vector.broadcast %72 : vector<1x256xf32> to vector<16x256xf32>
    %74 = arith.mulf %71, %73 : vector<16x256xf32>
    %75 = arith.addf %65, %74 : vector<16x256xf32>
    %76 = vector.extract_strided_slice %31 {offsets = [7, 0], sizes = [1, 256], strides = [1, 1]} : vector<9x256xf32> to vector<1x256xf32>
    %77 = vector.broadcast %76 : vector<1x256xf32> to vector<16x256xf32>
    %78 = arith.mulf %70, %77 : vector<16x256xf32>
    %79 = arith.addf %75, %78 : vector<16x256xf32>
    %c240_i32_21 = arith.constant 240 : i32
    %80 = tpu.dynamic_rotate %70 by %c240_i32_21 dim 1 : vector<16x256xf32>, i32 -> vector<16x256xf32>
    %81 = vector.extract_strided_slice %31 {offsets = [8, 0], sizes = [1, 256], strides = [1, 1]} : vector<9x256xf32> to vector<1x256xf32>
    %82 = vector.broadcast %81 : vector<1x256xf32> to vector<16x256xf32>
    %83 = arith.mulf %80, %82 : vector<16x256xf32>
    %84 = arith.addf %79, %83 : vector<16x256xf32>
    %c0_22 = arith.constant 0 : index
    %c0_23 = arith.constant 0 : index
    %85 = vector.load %arg5[%c0_22, %c0_23] : memref<1x256xf32, #tpu.memory_space<vmem>>, vector<1x256xf32>
    %86 = vector.broadcast %85 : vector<1x256xf32> to vector<16x256xf32>
    %87 = arith.addf %84, %86 : vector<16x256xf32>
    %cst_24 = arith.constant 0.000000e+00 : f32
    %cst_25 = arith.constant 6.000000e+00 : f32
    %88 = vector.broadcast %cst_24 : f32 to vector<16x256xf32>
    %89 = arith.maximumf %88, %87 : vector<16x256xf32>
    %90 = vector.broadcast %cst_25 : f32 to vector<16x256xf32>
    %91 = arith.minimumf %90, %89 : vector<16x256xf32>
    %c0_26 = arith.constant 0 : index
    %c0_27 = arith.constant 0 : index
    %92 = vector.load %arg6[%c0_26, %c0_27] : memref<256x128xf32, #tpu.memory_space<vmem>>, vector<256x128xf32>
    %cst_28 = arith.constant dense<0.000000e+00> : vector<16x128xf32>
    %93 = tpu.matmul %91, %92, %cst_28 {dimension_numbers = #tpu.dot_dimension_numbers<[1], [0], [0], [1], [0, 0, 1, 1], [], []>} : vector<16x256xf32>, vector<256x128xf32>, vector<16x128xf32> -> vector<16x128xf32>
    %c0_29 = arith.constant 0 : index
    %c0_30 = arith.constant 0 : index
    %94 = vector.load %arg7[%c0_29, %c0_30] : memref<1x128xf32, #tpu.memory_space<vmem>>, vector<1x128xf32>
    %95 = vector.broadcast %94 : vector<1x128xf32> to vector<16x128xf32>
    %96 = arith.addf %93, %95 : vector<16x128xf32>
    %97 = arith.addf %96, %0 : vector<16x128xf32>
    %c0_31 = arith.constant 0 : index
    %c0_32 = arith.constant 0 : index
    %98 = vector.load %arg8[%c0_31, %c0_32] : memref<16x128xf32, #tpu.memory_space<vmem>>, vector<16x128xf32>
    tpu.vector_store %arg8[%c0_31, %c0_32], %97 {strides = array<i32>} : memref<16x128xf32, #tpu.memory_space<vmem>>, vector<16x128xf32>,
    return
  }
  func.func @transform_0(%arg0: i32) -> (i32, i32) {
    %c0_i32 = arith.constant 0 : i32
    %c0_i32_0 = arith.constant 0 : i32
    return %arg0, %c0_i32 : i32, i32
  }
  func.func @transform_1(%arg0: i32) -> (i32, i32) {
    %c0_i32 = arith.constant 0 : i32
    %c0_i32_0 = arith.constant 0 : i32
    %c0_i32_1 = arith.constant 0 : i32
    return %c0_i32, %c0_i32_0 : i32, i32
  }
  func.func @transform_2(%arg0: i32) -> (i32, i32) {
    %c0_i32 = arith.constant 0 : i32
    %c0_i32_0 = arith.constant 0 : i32
    %c0_i32_1 = arith.constant 0 : i32
    return %c0_i32, %c0_i32_0 : i32, i32
  }
  func.func @transform_3(%arg0: i32) -> (i32, i32) {
    %c0_i32 = arith.constant 0 : i32
    %c0_i32_0 = arith.constant 0 : i32
    %c0_i32_1 = arith.constant 0 : i32
    return %c0_i32, %c0_i32_0 : i32, i32
  }
  func.func @transform_4(%arg0: i32) -> (i32, i32) {
    %c0_i32 = arith.constant 0 : i32
    %c0_i32_0 = arith.constant 0 : i32
    %c0_i32_1 = arith.constant 0 : i32
    return %c0_i32, %c0_i32_0 : i32, i32
  }
  func.func @transform_5(%arg0: i32) -> (i32, i32) {
    %c0_i32 = arith.constant 0 : i32
    %c0_i32_0 = arith.constant 0 : i32
    %c0_i32_1 = arith.constant 0 : i32
    return %c0_i32, %c0_i32_0 : i32, i32
  }
  func.func @transform_6(%arg0: i32) -> (i32, i32) {
    %c0_i32 = arith.constant 0 : i32
    %c0_i32_0 = arith.constant 0 : i32
    %c0_i32_1 = arith.constant 0 : i32
    return %c0_i32, %c0_i32_0 : i32, i32
  }
  func.func @transform_7(%arg0: i32) -> (i32, i32) {
    %c0_i32 = arith.constant 0 : i32
    %c0_i32_0 = arith.constant 0 : i32
    return %arg0, %c0_i32 : i32, i32
  }
}

</mosaic_0001>

<llo_original>
// kernel: tpu_custom_call.1
$region0: #{tpu_custom_call.1}
  #allocation0 [shape = 'u32[]', space=smem, size = 0x4, offset = 0x4, fixed_abs, tag = 'smem constant byte address 0x4 - core index']
  #allocation1 [shape = 'u32[144,128]{1,0:T(1,128)}', space=vmem, size = 0x12000, scoped, tag = 'internal scratch']
  %s0 = inlined_call_operand.hbm [shape: f32[32,128], index: 0, kind: input, shape index: {}]
  %s1 = inlined_call_operand.hbm [shape: f32[128,256], index: 1, kind: input, shape index: {}]
  %s2 = inlined_call_operand.vmem [shape: f32[1,256], index: 2, kind: input, shape index: {}]
  %s3 = inlined_call_operand.hbm [shape: f32[9,256], index: 3, kind: input, shape index: {}]
  %s4 = inlined_call_operand.vmem [shape: f32[1,256], index: 4, kind: input, shape index: {}]
  %s5 = inlined_call_operand.hbm [shape: f32[256,128], index: 5, kind: input, shape index: {}]
  %s6 = inlined_call_operand.vmem [shape: f32[1,128], index: 6, kind: input, shape index: {}]
  %s7 = inlined_call_operand.hbm [shape: f32[32,128], index: 7, kind: output, shape index: {}]
  %s8 = sld [smem:[#allocation0]]
  $region77: #{tpu_custom_call.1} parent=0
    _
  %s10 = ssub.s32 1, %s8
  %s11 = scalar_select 0, %s10, %s8
  $region1: #{tpu_custom_call.1} parent=0
    #allocation2 [shape = 'u8[16384]{0}', space=vmem, size = 0x4000, scoped, tag = 'input window, operand 0']
    #allocation3 [shape = 's32[2]{0}', space=sflag, size = 0x8, scoped, tag = 'scoped memory for tpu_custom_call.1']
    #allocation4 [shape = 's32[2]{0}', space=sflag, size = 0x8, scoped, tag = 'scoped memory for tpu_custom_call.1']
    #allocation5 [shape = 'u8[131072]{0}', space=vmem, size = 0x20000, scoped, tag = 'input window, operand 1, single buffered']
    #allocation6 [shape = 's32[1]{0}', space=sflag, size = 0x4, scoped, tag = 'scoped memory for tpu_custom_call.1']
    #allocation7 [shape = 'u8[16384]{0}', space=vmem, size = 0x4000, scoped, tag = 'input window, operand 3, single buffered']
    #allocation8 [shape = 'u8[131072]{0}', space=vmem, size = 0x20000, scoped, tag = 'input window, operand 5, single buffered']
    #allocation9 [shape = 's32[1]{0}', space=sflag, size = 0x4, scoped, tag = 'scoped memory for tpu_custom_call.1']
    #allocation10 [shape = 'u8[16384]{0}', space=vmem, size = 0x4000, scoped, tag = 'output window, operand 0']
    %12 = vsyncpa [#allocation3], 0
    %s13 = scalar_lea.sflag [#allocation3], 1
    %14 = vsyncpa %s13, 0
    %15 = vsyncpa [#allocation6], 0
    %16 = vsyncpa [#allocation9], 0
    %17 = vsyncpa [#allocation4], 0
    %s18 = scalar_lea.sflag [#allocation4], 1
    %19 = vsyncpa %s18, 0
    loop: start=0, step=1, limit=4
    $region2: #{tpu_custom_call.1} parent=1 // loop_pre_header
      _
    $region3: #{tpu_custom_call.1} parent=1 // loop_header
      %s21 = sphi 0, %s25
      %p22 = scmp.ge.s32.totalorder %s21, 4
      %s31 = sphi 0, %s33
      %s34 = sphi 0, %s31
      %s35 = sphi 0, %s34
      %s51 = sphi 0, %s35
      %s55 = sphi 0, %s55
      %s57 = sphi 0, %s55
      %s58 = sphi 0, %s57
      %s72 = sphi 0, %s58
      %s76 = sphi 0, %s76
      %s78 = sphi 0, %s76
      %s79 = sphi 0, %s78
      %s93 = sphi 0, %s79
      %s97 = sphi 0, %s97
      %s99 = sphi 0, %s97
      %s100 = sphi 0, %s99
      %s114 = sphi 0, %s100
      %s118 = sphi 0, %s118
      %s120 = sphi 0, %s118
      %s121 = sphi 0, %s120
      %s135 = sphi 0, %s121
      %s139 = sphi 0, %s139
      %s141 = sphi 0, %s139
      %s142 = sphi 0, %s141
      %s156 = sphi 0, %s142
      %s160 = sphi 0, %s160
      %s162 = sphi 0, %s160
      %s163 = sphi 0, %s162
      %s177 = sphi 0, %s163
      %s183 = sphi 0, %s185
      %s186 = sphi 0, %s183
      %s187 = sphi 0, %s186
      %s203 = sphi 0, %s187
    $region4: #{tpu_custom_call.1} parent=1 // loop_header_branch
      %24 = sbr.rel (%p22) target = $region8
    $region5: #{tpu_custom_call.1} parent=1 // loop_body
      %s26 = ssub.s32 %s21, 1
      %s27 = ssub.s32 %s21, 2
      %s28 = sadd.s32 %s21, 1
      %s29 = ssub.s32 %s21, %s28
      %p30 = scmp.eq.s32.totalorder %s29, 0
      %s32 = sadd.s32 %s31, 1
      %s33 = scalar_select %p30, %s31, %s32
      %p36 = pneg %p30
      %p37 = scmp.eq.s32.totalorder %s21, 1
      %p38 = por %p36, %p37
      %p39 = scmp.ne.s32.totalorder %s31, %s34
      %p40 = scmp.eq.s32.totalorder %s21, 0
      %p41 = por %p39, %p40
      %p42 = scmp.ne.s32.totalorder %s31, %s34
      %p43 = scmp.eq.s32.totalorder %s26, 1
      %p44 = por %p42, %p43
      %p45 = scmp.ne.s32.totalorder %s34, %s35
      %p46 = scmp.eq.s32.totalorder %s26, 0
      %p47 = por %p45, %p46
      %p48 = scmp.ne.s32.totalorder %s34, %s35
      %p49 = scmp.eq.s32.totalorder %s27, 1
      %p50 = por %p48, %p49
      %p52 = scmp.ne.s32.totalorder %s35, %s51
      %p53 = scmp.eq.s32.totalorder %s27, 0
      %p54 = por %p52, %p53
      %s56 = sadd.s32 %s55, 1
      %p59 = scmp.eq.s32.totalorder %s21, 1
      %p60 = scmp.ne.s32.totalorder %s55, %s57
      %p61 = scmp.eq.s32.totalorder %s21, 0
      %p62 = por %p60, %p61
      %p63 = scmp.ne.s32.totalorder %s55, %s57
      %p64 = scmp.eq.s32.totalorder %s26, 1
      %p65 = por %p63, %p64
      %p66 = scmp.ne.s32.totalorder %s57, %s58
      %p67 = scmp.eq.s32.totalorder %s26, 0
      %p68 = por %p66, %p67
      %p69 = scmp.ne.s32.totalorder %s57, %s58
      %p70 = scmp.eq.s32.totalorder %s27, 1
      %p71 = por %p69, %p70
      %p73 = scmp.ne.s32.totalorder %s58, %s72
      %p74 = scmp.eq.s32.totalorder %s27, 0
      %p75 = por %p73, %p74
      %s77 = sadd.s32 %s76, 1
      %p80 = scmp.eq.s32.totalorder %s21, 1
      %p81 = scmp.ne.s32.totalorder %s76, %s78
      %p82 = scmp.eq.s32.totalorder %s21, 0
      %p83 = por %p81, %p82
      %p84 = scmp.ne.s32.totalorder %s76, %s78
      %p85 = scmp.eq.s32.totalorder %s26, 1
      %p86 = por %p84, %p85
      %p87 = scmp.ne.s32.totalorder %s78, %s79
      %p88 = scmp.eq.s32.totalorder %s26, 0
      %p89 = por %p87, %p88
      %p90 = scmp.ne.s32.totalorder %s78, %s79
      %p91 = scmp.eq.s32.totalorder %s27, 1
      %p92 = por %p90, %p91
      %p94 = scmp.ne.s32.totalorder %s79, %s93
      %p95 = scmp.eq.s32.totalorder %s27, 0
      %p96 = por %p94, %p95
      %s98 = sadd.s32 %s97, 1
      %p101 = scmp.eq.s32.totalorder %s21, 1
      %p102 = scmp.ne.s32.totalorder %s97, %s99
      %p103 = scmp.eq.s32.totalorder %s21, 0
      %p104 = por %p102, %p103
      %p105 = scmp.ne.s32.totalorder %s97, %s99
      %p106 = scmp.eq.s32.totalorder %s26, 1
      %p107 = por %p105, %p106
      %p108 = scmp.ne.s32.totalorder %s99, %s100
      %p109 = scmp.eq.s32.totalorder %s26, 0
      %p110 = por %p108, %p109
      %p111 = scmp.ne.s32.totalorder %s99, %s100
      %p112 = scmp.eq.s32.totalorder %s27, 1
      %p113 = por %p111, %p112
      %p115 = scmp.ne.s32.totalorder %s100, %s114
      %p116 = scmp.eq.s32.totalorder %s27, 0
      %p117 = por %p115, %p116
      %s119 = sadd.s32 %s118, 1
      %p122 = scmp.eq.s32.totalorder %s21, 1
      %p123 = scmp.ne.s32.totalorder %s118, %s120
      %p124 = scmp.eq.s32.totalorder %s21, 0
      %p125 = por %p123, %p124
      %p126 = scmp.ne.s32.totalorder %s118, %s120
      %p127 = scmp.eq.s32.totalorder %s26, 1
      %p128 = por %p126, %p127
      %p129 = scmp.ne.s32.totalorder %s120, %s121
      %p130 = scmp.eq.s32.totalorder %s26, 0
      %p131 = por %p129, %p130
      %p132 = scmp.ne.s32.totalorder %s120, %s121
      %p133 = scmp.eq.s32.totalorder %s27, 1
      %p134 = por %p132, %p133
      %p136 = scmp.ne.s32.totalorder %s121, %s135
      %p137 = scmp.eq.s32.totalorder %s27, 0
      %p138 = por %p136, %p137
      %s140 = sadd.s32 %s139, 1
      %p143 = scmp.eq.s32.totalorder %s21, 1
      %p144 = scmp.ne.s32.totalorder %s139, %s141
      %p145 = scmp.eq.s32.totalorder %s21, 0
      %p146 = por %p144, %p145
      %p147 = scmp.ne.s32.totalorder %s139, %s141
      %p148 = scmp.eq.s32.totalorder %s26, 1
      %p149 = por %p147, %p148
      %p150 = scmp.ne.s32.totalorder %s141, %s142
      %p151 = scmp.eq.s32.totalorder %s26, 0
      %p152 = por %p150, %p151
      %p153 = scmp.ne.s32.totalorder %s141, %s142
      %p154 = scmp.eq.s32.totalorder %s27, 1
      %p155 = por %p153, %p154
      %p157 = scmp.ne.s32.totalorder %s142, %s156
      %p158 = scmp.eq.s32.totalorder %s27, 0
      %p159 = por %p157, %p158
      %s161 = sadd.s32 %s160, 1
      %p164 = scmp.eq.s32.totalorder %s21, 1
      %p165 = scmp.ne.s32.totalorder %s160, %s162
      %p166 = scmp.eq.s32.totalorder %s21, 0
      %p167 = por %p165, %p166
      %p168 = scmp.ne.s32.totalorder %s160, %s162
      %p169 = scmp.eq.s32.totalorder %s26, 1
      %p170 = por %p168, %p169
      %p171 = scmp.ne.s32.totalorder %s162, %s163
      %p172 = scmp.eq.s32.totalorder %s26, 0
      %p173 = por %p171, %p172
      %p174 = scmp.ne.s32.totalorder %s162, %s163
      %p175 = scmp.eq.s32.totalorder %s27, 1
      %p176 = por %p174, %p175
      %p178 = scmp.ne.s32.totalorder %s163, %s177
      %p179 = scmp.eq.s32.totalorder %s27, 0
      %p180 = por %p178, %p179
      %s181 = ssub.s32 %s21, %s28
      %p182 = scmp.eq.s32.totalorder %s181, 0
      %s184 = sadd.s32 %s183, 1
      %s185 = scalar_select %p182, %s183, %s184
      %p188 = pneg %p182
      %p189 = scmp.eq.s32.totalorder %s21, 1
      %p190 = por %p188, %p189
      %p191 = scmp.ne.s32.totalorder %s183, %s186
      %p192 = scmp.eq.s32.totalorder %s21, 0
      %p193 = por %p191, %p192
      %p194 = scmp.ne.s32.totalorder %s183, %s186
      %p195 = scmp.eq.s32.totalorder %s26, 1
      %p196 = por %p194, %p195
      %p197 = scmp.ne.s32.totalorder %s186, %s187
      %p198 = scmp.eq.s32.totalorder %s26, 0
      %p199 = por %p197, %p198
      %p200 = scmp.ne.s32.totalorder %s186, %s187
      %p201 = scmp.eq.s32.totalorder %s27, 1
      %p202 = por %p200, %p201
      %p204 = scmp.ne.s32.totalorder %s187, %s203
      %p205 = scmp.eq.s32.totalorder %s27, 0
      %p206 = por %p204, %p205
      %p207 = scmp.le.s32.totalorder 1, %s21
      %p208 = scmp.lt.s32.totalorder %s21, 3
      %p209 = pnand %p207, %p208
      %p210 = pneg %p209
      // Predicated region
      $region9: #{tpu_custom_call.1} parent=5 // pred_check
        _
      $region10: #{tpu_custom_call.1} parent=5 // pred_check_branch
        %212 = sbr.rel (%p209) target = $region12
      $region11: #{tpu_custom_call.1} parent=5 // pred_region
        %s213 = ssub.s32 %s21, 1
        // Predicated region
        $region13: #{tpu_custom_call.1} parent=11 // pred_check
          %p214 = pneg %p68
        $region14: #{tpu_custom_call.1} parent=11 // pred_check_branch
          %216 = sbr.rel (%p214) target = $region16
        $region15: #{tpu_custom_call.1} parent=11 // pred_region
          %s218 = ssub.s32 4096, 4096
          %219 = vsyncadd [#allocation6], %s218
          %s220 = sshll.u32 [#allocation5], 4
          %s221 = int_to_ptr.vmem [resolvable:$true] %s220
          %226 = dma.hbm_to_vmem [thread:$0]  %s1, 4096, %s221, [#allocation6], 256, 256, 16
        $region16: #{tpu_custom_call.1} parent=11 // pred_fallthru
          _
        // Predicated region
        $region17: #{tpu_custom_call.1} parent=11 // pred_check
          %p227 = pneg %p89
        $region18: #{tpu_custom_call.1} parent=11 // pred_check_branch
          %229 = sbr.rel (%p227) target = $region20
        $region19: #{tpu_custom_call.1} parent=11 // pred_region
          _
        $region20: #{tpu_custom_call.1} parent=11 // pred_fallthru
          _
        // Predicated region
        $region21: #{tpu_custom_call.1} parent=11 // pred_check
          %p230 = pneg %p110
        $region22: #{tpu_custom_call.1} parent=11 // pred_check_branch
          %232 = sbr.rel (%p230) target = $region24
        $region23: #{tpu_custom_call.1} parent=11 // pred_region
          %s234 = ssub.s32 512, 512
          %235 = vsyncadd [#allocation6], %s234
          %s236 = sshll.u32 [#allocation7], 4
          %s237 = int_to_ptr.vmem [resolvable:$true] %s236
          %242 = dma.hbm_to_vmem [thread:$0]  %s3, 512, %s237, [#allocation6], 256, 256, 16
        $region24: #{tpu_custom_call.1} parent=11 // pred_fallthru
          _
        // Predicated region
        $region25: #{tpu_custom_call.1} parent=11 // pred_check
          %p243 = pneg %p131
        $region26: #{tpu_custom_call.1} parent=11 // pred_check_branch
          %245 = sbr.rel (%p243) target = $region28
        $region27: #{tpu_custom_call.1} parent=11 // pred_region
          _
        $region28: #{tpu_custom_call.1} parent=11 // pred_fallthru
          _
        // Predicated region
        $region29: #{tpu_custom_call.1} parent=11 // pred_check
          %p246 = pneg %p152
        $region30: #{tpu_custom_call.1} parent=11 // pred_check_branch
          %248 = sbr.rel (%p246) target = $region32
        $region31: #{tpu_custom_call.1} parent=11 // pred_region
          %s250 = ssub.s32 4096, 4096
          %251 = vsyncadd [#allocation9], %s250
          %s252 = sshll.u32 [#allocation8], 4
          %s253 = int_to_ptr.vmem [resolvable:$true] %s252
          %258 = dma.hbm_to_vmem [thread:$0]  %s5, 4096, %s253, [#allocation9], 128, 128, 8
        $region32: #{tpu_custom_call.1} parent=11 // pred_fallthru
          _
        // Predicated region
        $region33: #{tpu_custom_call.1} parent=11 // pred_check
          %p259 = pneg %p173
        $region34: #{tpu_custom_call.1} parent=11 // pred_check_branch
          %261 = sbr.rel (%p259) target = $region36
        $region35: #{tpu_custom_call.1} parent=11 // pred_region
          _
        $region36: #{tpu_custom_call.1} parent=11 // pred_fallthru
          _
      $region12: #{tpu_custom_call.1} parent=5 // pred_fallthru
        _
      %p262 = scmp.lt.s32.totalorder %s21, 2
      // Predicated region
      $region37: #{tpu_custom_call.1} parent=5 // pred_check
        %p263 = pneg %p262
      $region38: #{tpu_custom_call.1} parent=5 // pred_check_branch
        %265 = sbr.rel (%p263) target = $region40
      $region39: #{tpu_custom_call.1} parent=5 // pred_region
        // Predicated region
        $region41: #{tpu_custom_call.1} parent=39 // pred_check
          %p266 = pneg %p41
        $region42: #{tpu_custom_call.1} parent=39 // pred_check_branch
          %268 = sbr.rel (%p266) target = $region44
        $region43: #{tpu_custom_call.1} parent=39 // pred_region
          %s269 = sand.u32 %s31, 1
          %s270 = scalar_lea.sflag [#allocation3], %s269
          %s271 = sand.u32 %s31, 1
          %s272 = smul.addr %s271, 16
          %s273 = scalar_lea.vmem [#allocation2], %s272
          %s274 = smul.u32 2, %s21
          %s276 = ssub.s32 256, 256
          %277 = vsyncadd %s270, %s276
          %s278 = smul.addr %s274, 128
          %s279 = scalar_lea.hbm %s0, %s278
          %s280 = sshll.u32 %s273, 4
          %s281 = int_to_ptr.vmem [resolvable:$true] %s280
          %286 = dma.hbm_to_vmem [thread:$0]  %s279, 256, %s281, %s270, 128, 128, 8
        $region44: #{tpu_custom_call.1} parent=39 // pred_fallthru
          _
      $region40: #{tpu_custom_call.1} parent=5 // pred_fallthru
        _
      %p287 = scmp.le.s32.totalorder 1, %s21
      %p288 = scmp.lt.s32.totalorder %s21, 3
      %p289 = pnand %p287, %p288
      %p290 = pneg %p289
      // Predicated region
      $region45: #{tpu_custom_call.1} parent=5 // pred_check
        _
      $region46: #{tpu_custom_call.1} parent=5 // pred_check_branch
        %292 = sbr.rel (%p289) target = $region48
      $region47: #{tpu_custom_call.1} parent=5 // pred_region
        %s293 = ssub.s32 %s21, 1
        %s294 = sand.u32 %s34, 1
        %s295 = scalar_lea.sflag [#allocation3], %s294
        %s296 = sand.u32 %s34, 1
        %s297 = smul.addr %s296, 16
        %s298 = scalar_lea.vmem [#allocation2], %s297
        // Predicated region
        $region49: #{tpu_custom_call.1} parent=47 // pred_check
          %p299 = pneg %p47
        $region50: #{tpu_custom_call.1} parent=47 // pred_check_branch
          %301 = sbr.rel (%p299) target = $region52
        $region51: #{tpu_custom_call.1} parent=47 // pred_region
          %302 = dma.done %s295, 256
        $region52: #{tpu_custom_call.1} parent=47 // pred_fallthru
          _
        // Predicated region
        $region53: #{tpu_custom_call.1} parent=47 // pred_check
          %p303 = pneg %p68
        $region54: #{tpu_custom_call.1} parent=47 // pred_check_branch
          %305 = sbr.rel (%p303) target = $region56
        $region55: #{tpu_custom_call.1} parent=47 // pred_region
          %306 = dma.done [#allocation6], 4096
        $region56: #{tpu_custom_call.1} parent=47 // pred_fallthru
          _
        // Predicated region
        $region57: #{tpu_custom_call.1} parent=47 // pred_check
          %p307 = pneg %p110
        $region58: #{tpu_custom_call.1} parent=47 // pred_check_branch
          %309 = sbr.rel (%p307) target = $region60
        $region59: #{tpu_custom_call.1} parent=47 // pred_region
          %310 = dma.done [#allocation6], 512
        $region60: #{tpu_custom_call.1} parent=47 // pred_fallthru
          _
        // Predicated region
        $region61: #{tpu_custom_call.1} parent=47 // pred_check
          %p311 = pneg %p152
        $region62: #{tpu_custom_call.1} parent=47 // pred_check_branch
          %313 = sbr.rel (%p311) target = $region64
        $region63: #{tpu_custom_call.1} parent=47 // pred_region
          %314 = dma.done [#allocation9], 4096
        $region64: #{tpu_custom_call.1} parent=47 // pred_fallthru
          _
        %s315 = sand.u32 %s34, 1
        %s316 = scalar_lea.sflag [#allocation3], %s315
        %s317 = sand.u32 %s34, 1
        %s318 = smul.addr %s317, 16
        %s319 = scalar_lea.vmem [#allocation2], %s318
        %p320 = pneg %p47
        %p321 = pneg %p44
        %p322 = pneg %p68
        %p323 = pneg %p65
        %p324 = pneg %p89
        %p325 = pneg %p86
        %p326 = pneg %p110
        %p327 = pneg %p107
        %p328 = pneg %p131
        %p329 = pneg %p128
        %p330 = pneg %p152
        %p331 = pneg %p149
        %p332 = pneg %p173
        %p333 = pneg %p170
        %p334 = pneg %p199
        %p335 = pneg %p196
        %s336 = sand.u32 %s186, 1
        %s337 = scalar_lea.sflag [#allocation4], %s336
        %s338 = sand.u32 %s186, 1
        %s339 = smul.addr %s338, 16
        %s340 = scalar_lea.vmem [#allocation10], %s339
        %s341 = smul.u32 2, %s26
        %s342 = smul.u32 2, %s26
        %v343 = vld [vmem:[%s298] sm:$0xff]
        %v344 = vld [vmem:[%s298 + $0x8] sm:$0xff]
        %v345 = vld [vmem:[#allocation5] sm:$0xff]
        %v346 = vld [vmem:[#allocation5 + $0x8] sm:$0xff]
        %v347 = vld [vmem:[#allocation5 + $0x10] sm:$0xff]
        %v348 = vld [vmem:[#allocation5 + $0x18] sm:$0xff]
        %v349 = vld [vmem:[#allocation5 + $0x20] sm:$0xff]
        %v350 = vld [vmem:[#allocation5 + $0x28] sm:$0xff]
        %v351 = vld [vmem:[#allocation5 + $0x30] sm:$0xff]
        %v352 = vld [vmem:[#allocation5 + $0x38] sm:$0xff]
        %v353 = vld [vmem:[#allocation5 + $0x40] sm:$0xff]
        %v354 = vld [vmem:[#allocation5 + $0x48] sm:$0xff]
        %v355 = vld [vmem:[#allocation5 + $0x50] sm:$0xff]
        %v356 = vld [vmem:[#allocation5 + $0x58] sm:$0xff]
        %v357 = vld [vmem:[#allocation5 + $0x60] sm:$0xff]
        %v358 = vld [vmem:[#allocation5 + $0x68] sm:$0xff]
        %v359 = vld [vmem:[#allocation5 + $0x70] sm:$0xff]
        %v360 = vld [vmem:[#allocation5 + $0x78] sm:$0xff]
        %v361 = vld [vmem:[#allocation5 + $0x80] sm:$0xff]
        %v362 = vld [vmem:[#allocation5 + $0x88] sm:$0xff]
        %v363 = vld [vmem:[#allocation5 + $0x90] sm:$0xff]
        %v364 = vld [vmem:[#allocation5 + $0x98] sm:$0xff]
        %v365 = vld [vmem:[#allocation5 + $0xa0] sm:$0xff]
        %v366 = vld [vmem:[#allocation5 + $0xa8] sm:$0xff]
        %v367 = vld [vmem:[#allocation5 + $0xb0] sm:$0xff]
        %v368 = vld [vmem:[#allocation5 + $0xb8] sm:$0xff]
        %v369 = vld [vmem:[#allocation5 + $0xc0] sm:$0xff]
        %v370 = vld [vmem:[#allocation5 + $0xc8] sm:$0xff]
        %v371 = vld [vmem:[#allocation5 + $0xd0] sm:$0xff]
        %v372 = vld [vmem:[#allocation5 + $0xd8] sm:$0xff]
        %v373 = vld [vmem:[#allocation5 + $0xe0] sm:$0xff]
        %v374 = vld [vmem:[#allocation5 + $0xe8] sm:$0xff]
        %v375 = vld [vmem:[#allocation5 + $0xf0] sm:$0xff]
        %v376 = vld [vmem:[#allocation5 + $0xf8] sm:$0xff]
        %v377 = vld [vmem:[%s2] sm:$0x3]
        %v379 = vlaneseq
        %v380 = vshrl.u32 %v379, 7
        %v381 = vsub.s32 0, %v380
        %v382 = vrot.slane %v377, %v381
        %v383 = vlaneseq
        %v384 = vshrl.u32 %v383, 7
        %v385 = vsub.s32 1, %v384
        %v386 = vrot.slane %v377, %v385
        %389 = vmatprep.subr.mxu0 %v346
        %390 = vmatpush1.msra.mxu0 %v345
        %391 = vmatprep.subr.mxu0 %v348
        %392 = vmatpush1.msra.mxu0 %v347
        %393 = vmatprep.subr.mxu0 %v350
        %394 = vmatpush1.msra.mxu0 %v349
        %395 = vmatprep.subr.mxu0 %v352
        %396 = vmatpush1.msra.mxu0 %v351
        %397 = vmatprep.subr.mxu0 %v354
        %398 = vmatpush1.msra.mxu0 %v353
        %399 = vmatprep.subr.mxu0 %v356
        %400 = vmatpush1.msra.mxu0 %v355
        %401 = vmatprep.subr.mxu0 %v358
        %402 = vmatpush1.msra.mxu0 %v357
        %403 = vmatprep.subr.mxu0 %v360
        %404 = vmatpush1.msra.mxu0 %v359
        %405 = vmatprep.subr.mxu0 %v362
        %406 = vmatpush1.msra.mxu0 %v361
        %407 = vmatprep.subr.mxu0 %v364
        %408 = vmatpush1.msra.mxu0 %v363
        %409 = vmatprep.subr.mxu0 %v366
        %410 = vmatpush1.msra.mxu0 %v365
        %411 = vmatprep.subr.mxu0 %v368
        %412 = vmatpush1.msra.mxu0 %v367
        %413 = vmatprep.subr.mxu0 %v370
        %414 = vmatpush1.msra.mxu0 %v369
        %415 = vmatprep.subr.mxu0 %v372
        %416 = vmatpush1.msra.mxu0 %v371
        %417 = vmatprep.subr.mxu0 %v374
        %418 = vmatpush1.msra.mxu0 %v373
        %419 = vmatprep.subr.mxu0 %v376
        %420 = vmatpush1.msra.mxu0 %v375
        %421 = vmatprep.subr.mxu0 0.0
        %422 = vmatpush1.msra.mxu0 0.0
        %423 = vmatprep.subr.mxu0 0.0
        %424 = vmatpush1.msra.mxu0 0.0
        %425 = vmatprep.subr.mxu0 0.0
        %426 = vmatpush1.msra.mxu0 0.0
        %427 = vmatprep.subr.mxu0 0.0
        %428 = vmatpush1.msra.mxu0 0.0
        %429 = vmatprep.subr.mxu0 0.0
        %430 = vmatpush1.msra.mxu0 0.0
        %431 = vmatprep.subr.mxu0 0.0
        %432 = vmatpush1.msra.mxu0 0.0
        %433 = vmatprep.subr.mxu0 0.0
        %434 = vmatpush1.msra.mxu0 0.0
        %435 = vmatprep.subr.mxu0 0.0
        %436 = vmatpush1.msra.mxu0 0.0
        %437 = vmatprep.subr.mxu0 0.0
        %438 = vmatpush1.msra.mxu0 0.0
        %439 = vmatprep.subr.mxu0 0.0
        %440 = vmatpush1.msra.mxu0 0.0
        %441 = vmatprep.subr.mxu0 0.0
        %442 = vmatpush1.msra.mxu0 0.0
        %443 = vmatprep.subr.mxu0 0.0
        %444 = vmatpush1.msra.mxu0 0.0
        %445 = vmatprep.subr.mxu0 0.0
        %446 = vmatpush1.msra.mxu0 0.0
        %447 = vmatprep.subr.mxu0 0.0
        %448 = vmatpush1.msra.mxu0 0.0
        %449 = vmatprep.subr.mxu0 0.0
        %450 = vmatpush1.msra.mxu0 0.0
        %451 = vmatprep.subr.mxu0 0.0
        %452 = vmatpush1.msra.mxu0 0.0
        %453 = vmatprep.mubr.f32.mxu0 0.0
        %454 = vmatmul.mubr.f32.gmra.mrb[0].mxu0 %v343
        %v455 = vpop.f32.mrb[0].mxu0
        %v456 = vadd.f32 %v382, %v455
        %v457 = vpop.f32.mrb[0].mxu0
        %v458 = vadd.f32 %v386, %v457
        %459 = vmatprep.mubr.f32.mxu0 0.0
        %460 = vmatmul.mubr.f32.gmra.mrb[0].mxu0 %v344
        %v461 = vpop.f32.mrb[0].mxu0
        %v462 = vadd.f32 %v382, %v461
        %v463 = vpop.f32.mrb[0].mxu0
        %v464 = vadd.f32 %v386, %v463
        %465 = vdwg.mxu0
        %v466 = vmax.f32 %v456, 0.0
        %v467 = vmax.f32 %v458, 0.0
        %v468 = vmax.f32 %v462, 0.0
        %v469 = vmax.f32 %v464, 0.0
        %v470 = vmin.f32 %v466, 6.0
        %v471 = vmin.f32 %v467, 6.0
        %v472 = vmin.f32 %v468, 6.0
        %v473 = vmin.f32 %v469, 6.0
        %v474 = vlaneseq
        %v475 = vshrl.u32 %v474, 7
        %v476 = vadd.s32 %v475, 8
        %vm477 = vcmp.lt.s32.totalorder %v475, 0
        %v478 = vsub.s32 0, %v475
        %v479 = vsel %vm477, %v478, %v475
        %v480 = vshrl.u32 %v479, 4
        %v481 = vand.u32 %v479, 15
        %v482 = vsub.s32 0, %v481
        %v483 = vsel %vm477, %v482, %v481
        %vm484 = vcmp.lt.s32.totalorder %v476, 0
        %v485 = vsub.s32 0, %v476
        %v486 = vsel %vm484, %v485, %v476
        %v487 = vshrl.u32 %v486, 4
        %v488 = vand.u32 %v486, 15
        %v489 = vsub.s32 0, %v488
        %v490 = vsel %vm484, %v489, %v488
        %vm491 = vcmp.ne.s32.totalorder %v483, 0
        %vm492 = vcmp.ne.s32.totalorder %v490, 0
        %vm493 = vcmp.lt.s32.totalorder %v483, 0
        %vm494 = vcmp.lt.s32.totalorder %v490, 0
        %vm495 = vmand %vm493, %vm491
        %vm496 = vmand %vm494, %vm492
        %v497 = vadd.s32 %v483, 16
        %v498 = vadd.s32 %v490, 16
        %v499 = vsel %vm495, %v497, %v483
        %v500 = vsel %vm496, %v498, %v490
        %vm501 = vcmp.ge.s32.totalorder %v499, 1
        %vm502 = vcmp.ge.s32.totalorder %v500, 1
        %vm503 = vcmp.le.s32.totalorder %v499, 14
        %vm504 = vcmp.le.s32.totalorder %v500, 14
        %v505 = vld [vmem:[#allocation7] sm:$0xff]
        %v506 = vld [vmem:[#allocation7 + $0x8] sm:$0xff]
        %v507 = vld [vmem:[#allocation7 + $0x10] sm:$0x1]
        %v508 = vld [vmem:[#allocation7 + $0x18] sm:$0x1]
        %v509 = vrot.slane %v470, 7
        %v510 = vrot.slane %v471, 7
        %v511 = vrot.slane %v472, 7
        %v512 = vrot.slane %v473, 7
        %vm513 = vcmp.lt.s32.totalorder %v475, 1
        %v514 = vsel %vm513, %v509, %v511
        %v515 = vsel %vm513, %v510, %v512
        %v516 = vsel %vm513, %v511, %v509
        %v517 = vsel %vm513, %v512, %v510
        %v518 = vsel %vm501, 1, 0
        %v519 = vsel %vm502, 1, 0
        %vm520 = vcmp.eq.s32.totalorder %v518, 1
        %vm521 = vcmp.eq.s32.totalorder %v519, 1
        %v522 = vsel %vm520, %v516, 0.0
        %v523 = vsel %vm520, %v517, 0.0
        %v524 = vsel %vm521, %v514, 0.0
        %v525 = vsel %vm521, %v515, 0.0
        %526 = vrot.lane.b32.xlu0 %v522, 16
        %v527 = vpop.permute.xlu0 %526
        %528 = vrot.lane.b32.xlu0 %v524, 16
        %v529 = vpop.permute.xlu0 %528
        %530 = vrot.lane.b32.xlu0 %v523, 16
        %v531 = vpop.permute.xlu0 %530
        %532 = vrot.lane.b32.xlu0 %v525, 16
        %v533 = vpop.permute.xlu0 %532
        %v534 = vlaneseq
        %v535 = vand.u32 %v534, 127
        %vm536 = vcmp.lt.s32.totalorder %v535, 16
        %v537 = vsel %vm536, %v527, %v531
        %v538 = vsel %vm536, %v529, %v533
        %v539 = vsel %vm536, %v531, %v527
        %v540 = vsel %vm536, %v533, %v529
        %v541 = vlaneseq
        %v542 = vshrl.u32 %v541, 7
        %v543 = vsub.s32 0, %v542
        %v544 = vrot.slane %v505, %v543
        %v545 = vlaneseq
        %v546 = vshrl.u32 %v545, 7
        %v547 = vsub.s32 0, %v546
        %v548 = vrot.slane %v506, %v547
        %v549 = vmul.f32 %v539, %v544
        %v550 = vmul.f32 %v537, %v548
        %v551 = vmul.f32 %v540, %v544
        %v552 = vmul.f32 %v538, %v548
        %v553 = vadd.f32 %v549, 0.0
        %v554 = vadd.f32 %v550, 0.0
        %v555 = vadd.f32 %v551, 0.0
        %v556 = vadd.f32 %v552, 0.0
        %v557 = vlaneseq
        %v558 = vshrl.u32 %v557, 7
        %v559 = vsub.s32 1, %v558
        %v560 = vrot.slane %v505, %v559
        %v561 = vlaneseq
        %v562 = vshrl.u32 %v561, 7
        %v563 = vsub.s32 1, %v562
        %v564 = vrot.slane %v506, %v563
        %v565 = vmul.f32 %v522, %v560
        %v566 = vmul.f32 %v523, %v564
        %v567 = vmul.f32 %v524, %v560
        %v568 = vmul.f32 %v525, %v564
        %v569 = vadd.f32 %v553, %v565
        %v570 = vadd.f32 %v554, %v566
        %v571 = vadd.f32 %v555, %v567
        %v572 = vadd.f32 %v556, %v568
        %573 = vrot.lane.b32.xlu0 %v522, 112
        %v574 = vpop.permute.xlu0 %573
        %575 = vrot.lane.b32.xlu0 %v524, 112
        %v576 = vpop.permute.xlu0 %575
        %577 = vrot.lane.b32.xlu0 %v523, 112
        %v578 = vpop.permute.xlu0 %577
        %579 = vrot.lane.b32.xlu0 %v525, 112
        %v580 = vpop.permute.xlu0 %579
        %vm581 = vcmp.lt.s32.totalorder %v535, 112
        %v582 = vsel %vm581, %v574, %v578
        %v583 = vsel %vm581, %v576, %v580
        %v584 = vsel %vm581, %v578, %v574
        %v585 = vsel %vm581, %v580, %v576
        %v586 = vlaneseq
        %v587 = vshrl.u32 %v586, 7
        %v588 = vsub.s32 2, %v587
        %v589 = vrot.slane %v505, %v588
        %v590 = vlaneseq
        %v591 = vshrl.u32 %v590, 7
        %v592 = vsub.s32 2, %v591
        %v593 = vrot.slane %v506, %v592
        %v594 = vmul.f32 %v582, %v589
        %v595 = vmul.f32 %v584, %v593
        %v596 = vmul.f32 %v583, %v589
        %v597 = vmul.f32 %v585, %v593
        %v598 = vadd.f32 %v569, %v594
        %v599 = vadd.f32 %v570, %v595
        %v600 = vadd.f32 %v571, %v596
        %v601 = vadd.f32 %v572, %v597
        %602 = vrot.lane.b32.xlu0 %v470, 16
        %v603 = vpop.permute.xlu0 %602
        %604 = vrot.lane.b32.xlu0 %v472, 16
        %v605 = vpop.permute.xlu0 %604
        %606 = vrot.lane.b32.xlu0 %v471, 16
        %v607 = vpop.permute.xlu0 %606
        %608 = vrot.lane.b32.xlu0 %v473, 16
        %v609 = vpop.permute.xlu0 %608
        %v610 = vsel %vm536, %v603, %v607
        %v611 = vsel %vm536, %v605, %v609
        %v612 = vsel %vm536, %v607, %v603
        %v613 = vsel %vm536, %v609, %v605
        %v614 = vlaneseq
        %v615 = vshrl.u32 %v614, 7
        %v616 = vsub.s32 3, %v615
        %v617 = vrot.slane %v505, %v616
        %v618 = vlaneseq
        %v619 = vshrl.u32 %v618, 7
        %v620 = vsub.s32 3, %v619
        %v621 = vrot.slane %v506, %v620
        %v622 = vmul.f32 %v612, %v617
        %v623 = vmul.f32 %v610, %v621
        %v624 = vmul.f32 %v613, %v617
        %v625 = vmul.f32 %v611, %v621
        %v626 = vadd.f32 %v598, %v622
        %v627 = vadd.f32 %v599, %v623
        %v628 = vadd.f32 %v600, %v624
        %v629 = vadd.f32 %v601, %v625
        %v630 = vlaneseq
        %v631 = vshrl.u32 %v630, 7
        %v632 = vsub.s32 4, %v631
        %v633 = vrot.slane %v505, %v632
        %v634 = vlaneseq
        %v635 = vshrl.u32 %v634, 7
        %v636 = vsub.s32 4, %v635
        %v637 = vrot.slane %v506, %v636
        %v638 = vmul.f32 %v470, %v633
        %v639 = vmul.f32 %v471, %v637
        %v640 = vmul.f32 %v472, %v633
        %v641 = vmul.f32 %v473, %v637
        %v642 = vadd.f32 %v626, %v638
        %v643 = vadd.f32 %v627, %v639
        %v644 = vadd.f32 %v628, %v640
        %v645 = vadd.f32 %v629, %v641
        %646 = vrot.lane.b32.xlu0 %v470, 112
        %v647 = vpop.permute.xlu0 %646
        %648 = vrot.lane.b32.xlu0 %v472, 112
        %v649 = vpop.permute.xlu0 %648
        %650 = vrot.lane.b32.xlu0 %v471, 112
        %v651 = vpop.permute.xlu0 %650
        %652 = vrot.lane.b32.xlu0 %v473, 112
        %v653 = vpop.permute.xlu0 %652
        %v654 = vsel %vm581, %v647, %v651
        %v655 = vsel %vm581, %v649, %v653
        %v656 = vsel %vm581, %v651, %v647
        %v657 = vsel %vm581, %v653, %v649
        %v658 = vlaneseq
        %v659 = vshrl.u32 %v658, 7
        %v660 = vsub.s32 5, %v659
        %v661 = vrot.slane %v505, %v660
        %v662 = vlaneseq
        %v663 = vshrl.u32 %v662, 7
        %v664 = vsub.s32 5, %v663
        %v665 = vrot.slane %v506, %v664
        %v666 = vmul.f32 %v654, %v661
        %v667 = vmul.f32 %v656, %v665
        %v668 = vmul.f32 %v655, %v661
        %v669 = vmul.f32 %v657, %v665
        %v670 = vadd.f32 %v642, %v666
        %v671 = vadd.f32 %v643, %v667
        %v672 = vadd.f32 %v644, %v668
        %v673 = vadd.f32 %v645, %v669
        %v674 = vrot.slane %v470, 1
        %v675 = vrot.slane %v471, 1
        %v676 = vrot.slane %v472, 1
        %v677 = vrot.slane %v473, 1
        %vm678 = vcmp.lt.s32.totalorder %v475, 7
        %v679 = vsel %vm678, %v674, %v676
        %v680 = vsel %vm678, %v675, %v677
        %v681 = vsel %vm678, %v676, %v674
        %v682 = vsel %vm678, %v677, %v675
        %v683 = vsel %vm503, 1, 0
        %v684 = vsel %vm504, 1, 0
        %vm685 = vcmp.eq.s32.totalorder %v683, 1
        %vm686 = vcmp.eq.s32.totalorder %v684, 1
        %v687 = vsel %vm685, %v679, 0.0
        %v688 = vsel %vm685, %v680, 0.0
        %v689 = vsel %vm686, %v681, 0.0
        %v690 = vsel %vm686, %v682, 0.0
        %691 = vrot.lane.b32.xlu0 %v687, 16
        %v692 = vpop.permute.xlu0 %691
        %693 = vrot.lane.b32.xlu0 %v689, 16
        %v694 = vpop.permute.xlu0 %693
        %695 = vrot.lane.b32.xlu0 %v688, 16
        %v696 = vpop.permute.xlu0 %695
        %697 = vrot.lane.b32.xlu0 %v690, 16
        %v698 = vpop.permute.xlu0 %697
        %v699 = vsel %vm536, %v692, %v696
        %v700 = vsel %vm536, %v694, %v698
        %v701 = vsel %vm536, %v696, %v692
        %v702 = vsel %vm536, %v698, %v694
        %v703 = vlaneseq
        %v704 = vshrl.u32 %v703, 7
        %v705 = vsub.s32 6, %v704
        %v706 = vrot.slane %v505, %v705
        %v707 = vlaneseq
        %v708 = vshrl.u32 %v707, 7
        %v709 = vsub.s32 6, %v708
        %v710 = vrot.slane %v506, %v709
        %v711 = vmul.f32 %v701, %v706
        %v712 = vmul.f32 %v699, %v710
        %v713 = vmul.f32 %v702, %v706
        %v714 = vmul.f32 %v700, %v710
        %v715 = vadd.f32 %v670, %v711
        %v716 = vadd.f32 %v671, %v712
        %v717 = vadd.f32 %v672, %v713
        %v718 = vadd.f32 %v673, %v714
        %v719 = vlaneseq
        %v720 = vshrl.u32 %v719, 7
        %v721 = vsub.s32 7, %v720
        %v722 = vrot.slane %v505, %v721
        %v723 = vlaneseq
        %v724 = vshrl.u32 %v723, 7
        %v725 = vsub.s32 7, %v724
        %v726 = vrot.slane %v506, %v725
        %v727 = vmul.f32 %v687, %v722
        %v728 = vmul.f32 %v688, %v726
        %v729 = vmul.f32 %v689, %v722
        %v730 = vmul.f32 %v690, %v726
        %v731 = vadd.f32 %v715, %v727
        %v732 = vadd.f32 %v716, %v728
        %v733 = vadd.f32 %v717, %v729
        %v734 = vadd.f32 %v718, %v730
        %735 = vrot.lane.b32.xlu0 %v687, 112
        %v736 = vpop.permute.xlu0 %735
        %737 = vrot.lane.b32.xlu0 %v689, 112
        %v738 = vpop.permute.xlu0 %737
        %739 = vrot.lane.b32.xlu0 %v688, 112
        %v740 = vpop.permute.xlu0 %739
        %741 = vrot.lane.b32.xlu0 %v690, 112
        %v742 = vpop.permute.xlu0 %741
        %v743 = vsel %vm581, %v736, %v740
        %v744 = vsel %vm581, %v738, %v742
        %v745 = vsel %vm581, %v740, %v736
        %v746 = vsel %vm581, %v742, %v738
        %v747 = vlaneseq
        %v748 = vshrl.u32 %v747, 7
        %v749 = vsub.s32 0, %v748
        %v750 = vrot.slane %v507, %v749
        %v751 = vlaneseq
        %v752 = vshrl.u32 %v751, 7
        %v753 = vsub.s32 0, %v752
        %v754 = vrot.slane %v508, %v753
        %v755 = vmul.f32 %v743, %v750
        %v756 = vmul.f32 %v745, %v754
        %v757 = vmul.f32 %v744, %v750
        %v758 = vmul.f32 %v746, %v754
        %v759 = vadd.f32 %v731, %v755
        %v760 = vadd.f32 %v732, %v756
        %v761 = vadd.f32 %v733, %v757
        %v762 = vadd.f32 %v734, %v758
        %v763 = vld [vmem:[%s4] sm:$0x3]
        %v765 = vlaneseq
        %v766 = vshrl.u32 %v765, 7
        %v767 = vsub.s32 0, %v766
        %v768 = vrot.slane %v763, %v767
        %v769 = vlaneseq
        %v770 = vshrl.u32 %v769, 7
        %v771 = vsub.s32 1, %v770
        %v772 = vrot.slane %v763, %v771
        %v775 = vadd.f32 %v759, %v768
        %v776 = vadd.f32 %v760, %v772
        %v777 = vadd.f32 %v761, %v768
        %v778 = vadd.f32 %v762, %v772
        %v779 = vmax.f32 %v775, 0.0
        %v780 = vmax.f32 %v776, 0.0
        %v781 = vmax.f32 %v777, 0.0
        %v782 = vmax.f32 %v778, 0.0
        %v783 = vmin.f32 %v779, 6.0
        %v784 = vmin.f32 %v780, 6.0
        %v785 = vmin.f32 %v781, 6.0
        %v786 = vmin.f32 %v782, 6.0
        %v787 = vld [vmem:[#allocation8] sm:$0xff]
        %v788 = vld [vmem:[#allocation8 + $0x8] sm:$0xff]
        %v789 = vld [vmem:[#allocation8 + $0x10] sm:$0xff]
        %v790 = vld [vmem:[#allocation8 + $0x18] sm:$0xff]
        %v791 = vld [vmem:[#allocation8 + $0x20] sm:$0xff]
        %v792 = vld [vmem:[#allocation8 + $0x28] sm:$0xff]
        %v793 = vld [vmem:[#allocation8 + $0x30] sm:$0xff]
        %v794 = vld [vmem:[#allocation8 + $0x38] sm:$0xff]
        %v795 = vld [vmem:[#allocation8 + $0x40] sm:$0xff]
        %v796 = vld [vmem:[#allocation8 + $0x48] sm:$0xff]
        %v797 = vld [vmem:[#allocation8 + $0x50] sm:$0xff]
        %v798 = vld [vmem:[#allocation8 + $0x58] sm:$0xff]
        %v799 = vld [vmem:[#allocation8 + $0x60] sm:$0xff]
        %v800 = vld [vmem:[#allocation8 + $0x68] sm:$0xff]
        %v801 = vld [vmem:[#allocation8 + $0x70] sm:$0xff]
        %v802 = vld [vmem:[#allocation8 + $0x78] sm:$0xff]
        %v803 = vld [vmem:[#allocation8 + $0x80] sm:$0xff]
        %v804 = vld [vmem:[#allocation8 + $0x88] sm:$0xff]
        %v805 = vld [vmem:[#allocation8 + $0x90] sm:$0xff]
        %v806 = vld [vmem:[#allocation8 + $0x98] sm:$0xff]
        %v807 = vld [vmem:[#allocation8 + $0xa0] sm:$0xff]
        %v808 = vld [vmem:[#allocation8 + $0xa8] sm:$0xff]
        %v809 = vld [vmem:[#allocation8 + $0xb0] sm:$0xff]
        %v810 = vld [vmem:[#allocation8 + $0xb8] sm:$0xff]
        %v811 = vld [vmem:[#allocation8 + $0xc0] sm:$0xff]
        %v812 = vld [vmem:[#allocation8 + $0xc8] sm:$0xff]
        %v813 = vld [vmem:[#allocation8 + $0xd0] sm:$0xff]
        %v814 = vld [vmem:[#allocation8 + $0xd8] sm:$0xff]
        %v815 = vld [vmem:[#allocation8 + $0xe0] sm:$0xff]
        %v816 = vld [vmem:[#allocation8 + $0xe8] sm:$0xff]
        %v817 = vld [vmem:[#allocation8 + $0xf0] sm:$0xff]
        %v818 = vld [vmem:[#allocation8 + $0xf8] sm:$0xff]
        %v819 = vld [vmem:[%s6] sm:$0x1]
        %v821 = vlaneseq
        %v822 = vshrl.u32 %v821, 7
        %v823 = vsub.s32 0, %v822
        %v824 = vrot.slane %v819, %v823
        %826 = vmatprep.subr.mxu0 0.0
        %827 = vmatpush1.msra.mxu0 %v787
        %828 = vmatprep.subr.mxu0 0.0
        %829 = vmatpush1.msra.mxu0 %v788
        %830 = vmatprep.subr.mxu0 0.0
        %831 = vmatpush1.msra.mxu0 %v789
        %832 = vmatprep.subr.mxu0 0.0
        %833 = vmatpush1.msra.mxu0 %v790
        %834 = vmatprep.subr.mxu0 0.0
        %835 = vmatpush1.msra.mxu0 %v791
        %836 = vmatprep.subr.mxu0 0.0
        %837 = vmatpush1.msra.mxu0 %v792
        %838 = vmatprep.subr.mxu0 0.0
        %839 = vmatpush1.msra.mxu0 %v793
        %840 = vmatprep.subr.mxu0 0.0
        %841 = vmatpush1.msra.mxu0 %v794
        %842 = vmatprep.subr.mxu0 0.0
        %843 = vmatpush1.msra.mxu0 %v795
        %844 = vmatprep.subr.mxu0 0.0
        %845 = vmatpush1.msra.mxu0 %v796
        %846 = vmatprep.subr.mxu0 0.0
        %847 = vmatpush1.msra.mxu0 %v797
        %848 = vmatprep.subr.mxu0 0.0
        %849 = vmatpush1.msra.mxu0 %v798
        %850 = vmatprep.subr.mxu0 0.0
        %851 = vmatpush1.msra.mxu0 %v799
        %852 = vmatprep.subr.mxu0 0.0
        %853 = vmatpush1.msra.mxu0 %v800
        %854 = vmatprep.subr.mxu0 0.0
        %855 = vmatpush1.msra.mxu0 %v801
        %856 = vmatprep.subr.mxu0 0.0
        %857 = vmatpush1.msra.mxu0 %v802
        %858 = vmatprep.subr.mxu0 0.0
        %859 = vmatpush1.msra.mxu0 %v803
        %860 = vmatprep.subr.mxu0 0.0
        %861 = vmatpush1.msra.mxu0 %v804
        %862 = vmatprep.subr.mxu0 0.0
        %863 = vmatpush1.msra.mxu0 %v805
        %864 = vmatprep.subr.mxu0 0.0
        %865 = vmatpush1.msra.mxu0 %v806
        %866 = vmatprep.subr.mxu0 0.0
        %867 = vmatpush1.msra.mxu0 %v807
        %868 = vmatprep.subr.mxu0 0.0
        %869 = vmatpush1.msra.mxu0 %v808
        %870 = vmatprep.subr.mxu0 0.0
        %871 = vmatpush1.msra.mxu0 %v809
        %872 = vmatprep.subr.mxu0 0.0
        %873 = vmatpush1.msra.mxu0 %v810
        %874 = vmatprep.subr.mxu0 0.0
        %875 = vmatpush1.msra.mxu0 %v811
        %876 = vmatprep.subr.mxu0 0.0
        %877 = vmatpush1.msra.mxu0 %v812
        %878 = vmatprep.subr.mxu0 0.0
        %879 = vmatpush1.msra.mxu0 %v813
        %880 = vmatprep.subr.mxu0 0.0
        %881 = vmatpush1.msra.mxu0 %v814
        %882 = vmatprep.subr.mxu0 0.0
        %883 = vmatpush1.msra.mxu0 %v815
        %884 = vmatprep.subr.mxu0 0.0
        %885 = vmatpush1.msra.mxu0 %v816
        %886 = vmatprep.subr.mxu0 0.0
        %887 = vmatpush1.msra.mxu0 %v817
        %888 = vmatprep.subr.mxu0 0.0
        %889 = vmatpush1.msra.mxu0 %v818
        %890 = vmatprep.mubr.f32.mxu0 %v784
        %891 = vmatmul.mubr.f32.gmra.mrb[0].mxu0 %v783
        %v892 = vpop.f32.mrb[0].mxu0
        %v893 = vadd.f32 %v824, %v892
        %v894 = vpop.f32.mrb[0].mxu0
        %895 = vmatprep.mubr.f32.mxu0 %v786
        %896 = vmatmul.mubr.f32.gmra.mrb[0].mxu0 %v785
        %v897 = vpop.f32.mrb[0].mxu0
        %v898 = vadd.f32 %v824, %v897
        %v899 = vpop.f32.mrb[0].mxu0
        %900 = vdwg.mxu0
        %v901 = vadd.f32 %v893, %v343
        %v902 = vadd.f32 %v898, %v344
        %903 = vst [vmem:[%s340] sm:$0xff] %v901
        %904 = vst [vmem:[%s340 + $0x8] sm:$0xff] %v902
        %s905 = sand.u32 %s186, 1
        %s906 = scalar_lea.sflag [#allocation4], %s905
        %s907 = sand.u32 %s186, 1
        %s908 = smul.addr %s907, 16
        %s909 = scalar_lea.vmem [#allocation10], %s908
        // Predicated region
        $region65: #{tpu_custom_call.1} parent=47 // pred_check
          %p910 = pneg %p196
        $region66: #{tpu_custom_call.1} parent=47 // pred_check_branch
          %912 = sbr.rel (%p910) target = $region68
        $region67: #{tpu_custom_call.1} parent=47 // pred_region
          %s913 = smul.u32 2, %s26
          %s915 = ssub.s32 256, 256
          %916 = vsyncadd %s906, %s915
          %s917 = smul.addr %s913, 128
          %s918 = scalar_lea.hbm %s7, %s917
          %s919 = sshll.u32 %s909, 4
          %s920 = int_to_ptr.vmem [resolvable:$true] %s919
          %925 = dma.vmem_to_hbm [thread:$0]  %s920, 256, %s918, %s906, 128, 128, 8
        $region68: #{tpu_custom_call.1} parent=47 // pred_fallthru
          _
      $region48: #{tpu_custom_call.1} parent=5 // pred_fallthru
        _
      %p926 = scmp.le.s32.totalorder 2, %s21
      // Predicated region
      $region69: #{tpu_custom_call.1} parent=5 // pred_check
        %p927 = pneg %p926
      $region70: #{tpu_custom_call.1} parent=5 // pred_check_branch
        %929 = sbr.rel (%p927) target = $region72
      $region71: #{tpu_custom_call.1} parent=5 // pred_region
        %s930 = ssub.s32 %s21, 2
        // Predicated region
        $region73: #{tpu_custom_call.1} parent=71 // pred_check
          %p931 = pneg %p202
        $region74: #{tpu_custom_call.1} parent=71 // pred_check_branch
          %933 = sbr.rel (%p931) target = $region76
        $region75: #{tpu_custom_call.1} parent=71 // pred_region
          %s934 = sand.u32 %s187, 1
          %s935 = scalar_lea.sflag [#allocation4], %s934
          %s936 = sand.u32 %s187, 1
          %s937 = smul.addr %s936, 16
          %s938 = scalar_lea.vmem [#allocation10], %s937
          %939 = dma.done %s935, 256
        $region76: #{tpu_custom_call.1} parent=71 // pred_fallthru
          _
      $region72: #{tpu_custom_call.1} parent=5 // pred_fallthru
        _
    $region6: #{tpu_custom_call.1} parent=1 // loop_footer
      %s25 = sadd.s32 1, %s21
    $region7: #{tpu_custom_call.1} parent=1 // loop_footer_branch
      %20 = sbr.rel target = $region3
    $region8: #{tpu_custom_call.1} parent=1 // loop_exit
      _
    %940 = vsyncpa [#allocation3], 1
    %s941 = scalar_lea.sflag [#allocation3], 1
    %942 = vsyncpa %s941, 1
    %943 = vsyncpa [#allocation6], 1
    %944 = vsyncpa [#allocation9], 1
    %945 = vsyncpa [#allocation4], 1
    %s946 = scalar_lea.sflag [#allocation4], 1
    %947 = vsyncpa %s946, 1

</llo_original>
